<compile_context>
chip_gen: v7x
topology: tpu7x:2x2x1
jax: 0.10.0
libtpu: 0.0.40
codegen_flags: <defaults>
</compile_context>

<pallas_src>
import math

import jax
import jax.numpy as jnp
from jax.experimental import pallas as pl
from jax.experimental.pallas import tpu as pltpu


def _round_up(n, m):
    return ((n + m - 1) // m) * m


def _attention_kernel(x_ref, w_ref, b_ref, out_ref):
    # x_ref:   (TB, S, F) batch tile of x (last tile may be ragged -> junk rows,
    #          their outputs are dropped on writeback)
    # w_ref:   (1, F) weight row, grid-constant (revisit-skip, stays resident)
    # b_ref:   (S, 1) step bias column, grid-constant
    # out_ref: (TB, F) output tile
    TB = x_ref.shape[0]
    w = w_ref[...]                                         # (1, F) f32, hoisted
    b = b_ref[...]                                         # (S, 1) f32, hoisted

    def row_body(r, carry):
        xr = x_ref[r].astype(jnp.float32)                  # (S, F) contiguous row slab
        # eij = x_r @ w as a VPU multiply + lane reduce (rank-1 weight: skip the MXU).
        eij = jnp.sum(xr * w, axis=-1, keepdims=True)      # (S, 1) keepdims layout
        e = jnp.exp(jnp.tanh(eij + b))                     # (S, 1)
        denom = jnp.sum(e, axis=0, keepdims=True)          # (1, 1)
        # exact reciprocal (approx=True would risk the 1e-5 tolerance)
        a = e * pl.reciprocal(denom, approx=False) + 1e-10  # (S, 1)
        out_row = jnp.sum(a * xr, axis=0, keepdims=True)   # (1, F) lane-splat + sublane reduce
        out_ref[pl.ds(r, 1), :] = out_row.astype(out_ref.dtype)
        return carry

    jax.lax.fori_loop(0, TB, row_body, 0, unroll=True if TB <= 8 else 1)
    # TODO(synk): optional `mask` argument of the PyTorch forward is not wired in
    # (mask=None path only).  MXU offload of the eij matvec (w padded to (F,128))
    # could shave VALU work on v7x; omitted since v5e/v6e are purely HBM-bound.


def attention_forward(x, weight, bias, *, x_tile_bytes=None, min_grid_steps=8):
    """x: (B, S, F), weight: (F, 1) f32, bias: (S,) f32 -> ((B, F) f32, (F, 1) f32)."""
    B, S, F = x.shape

    w_row = weight.reshape(1, F).astype(jnp.float32)   # lane-dense rank-1 weight
    b_col = bias.reshape(S, 1).astype(jnp.float32)     # keepdims-layout step bias

    # ---- per-generation VMEM budget (v5e/v6e: 128 MiB physical, v7x: 64 MiB) ----
    try:
        vmem_cap = int(pltpu.get_tpu_info().vmem_capacity_bytes)
    except Exception:
        vmem_cap = 64 << 20
    vmem_limit = int(min((vmem_cap * 3) // 4, 96 << 20))
    if x_tile_bytes is None:
        # ~10-12 MiB tiles: double-buffered x stream + out + internal scratch stays
        # well under the limit on every generation while amortizing ~0.35us/step.
        x_tile_bytes = min(12 << 20, vmem_limit // 5)

    # ---- batch tile: biggest multiple-of-8 row count within budget, then shrink
    # ---- until the grid has enough steps for megacore split + DMA prefetch overlap.
    bytes_per_row = S * F * x.dtype.itemsize
    TB = max(8, (x_tile_bytes // max(bytes_per_row, 1)) // 8 * 8)
    TB = min(TB, _round_up(B, 8))
    while TB > 8 and (B + TB - 1) // TB < min_grid_steps:
        TB = max(8, (TB // 2 // 8) * 8)
    grid = (pl.cdiv(B, TB),)

    itemsize = x.dtype.itemsize
    cost = pl.CostEstimate(
        flops=4 * B * S * F,
        transcendentals=2 * B * S,
        bytes_accessed=B * S * F * itemsize + B * F * 4 + (F + S) * 4,
    )

    out = pl.pallas_call(
        _attention_kernel,
        out_shape=jax.ShapeDtypeStruct((B, F), jnp.float32),
        grid_spec=pltpu.PrefetchScalarGridSpec(
            num_scalar_prefetch=0,
            grid=grid,
            in_specs=[
                pl.BlockSpec((TB, S, F), lambda i: (i, 0, 0)),  # streamed x tile (unpadded)
                pl.BlockSpec((1, F), lambda i: (0, 0)),         # weight, constant -> revisit-skip
                pl.BlockSpec((S, 1), lambda i: (0, 0)),         # bias, constant -> revisit-skip
            ],
            out_specs=pl.BlockSpec((TB, F), lambda i: (i, 0)),
        ),
        compiler_params=pltpu.CompilerParams(
            dimension_semantics=("parallel",),
            vmem_limit_bytes=vmem_limit,
        ),
        cost_estimate=cost,
    )(x, w_row, b_col)

    return out, weight


def init_params(key, feature_dim, step_dim):
    # Matches nn.init.xavier_uniform_ on a (feature_dim, 1) tensor:
    # bound = sqrt(6 / (fan_in + fan_out)) with fan_in=1, fan_out=feature_dim
    bound = math.sqrt(6.0 / (feature_dim + 1))
    weight = jax.random.uniform(
        key, (feature_dim, 1), minval=-bound, maxval=bound, dtype=jnp.float32)
    bias = jnp.zeros((step_dim,), dtype=jnp.float32)
    return weight, bias


def _reference(x, weight, bias):
    # Pure-JAX reference of the PyTorch forward (mask=None), for a sanity check.
    B, S, F = x.shape
    eij = (x.reshape(-1, F) @ weight).reshape(B, S) + bias[None, :]
    eij = jnp.tanh(eij)
    a = jnp.exp(eij)
    a = a / jnp.sum(a, axis=1, keepdims=True) + 1e-10
    return jnp.sum(x * a[..., None], axis=1)


if __name__ == "__main__":
    key = jax.random.PRNGKey(0)
    k_w, k_x = jax.random.split(key)

    batch, step_dim, feature_dim = 2, 8, 32

    weight, bias = init_params(k_w, feature_dim, step_dim)
    x = jax.random.normal(k_x, (batch, step_dim, feature_dim), dtype=jnp.float32)

    out, w_ret = attention_forward(x, weight, bias)
    out = jax.block_until_ready(out)

    ref = _reference(x, weight, bias)
    assert out.shape == (batch, feature_dim)
    assert w_ret.shape == (feature_dim, 1)
    assert jnp.allclose(out, ref, atol=1e-5, rtol=1e-5)

    print("KERNEL_OK")
</pallas_src>

<mosaic_0001>
module attributes {stable_mosaic.version = 11 : i64} {
  func.func @_attention_kernel(%arg0: i32, %arg1: memref<8x8x32xf32, #tpu.memory_space<vmem>>, %arg2: memref<1x32xf32, #tpu.memory_space<vmem>>, %arg3: memref<8x1xf32, #tpu.memory_space<vmem>>, %arg4: memref<8x32xf32, #tpu.memory_space<vmem>>) attributes {dimension_semantics = [#tpu.dimension_semantics<parallel>], iteration_bounds = array<i64: 1>, scalar_prefetch = 0 : i64, scratch_operands = 0 : i64, tpu.core_type = #tpu.core_type<tc>, window_params = [{transform_indices = @transform_0, window_bounds = array<i64: 8, 8, 32>}, {pipeline_mode = #tpu.pipeline_mode<synchronous>, transform_indices = @transform_1, window_bounds = array<i64: 1, 32>}, {pipeline_mode = #tpu.pipeline_mode<synchronous>, transform_indices = @transform_2, window_bounds = array<i64: 8, 1>}, {transform_indices = @transform_3, window_bounds = array<i64: 8, 32>}]} {
    %c0 = arith.constant 0 : index
    %c0_0 = arith.constant 0 : index
    %0 = vector.load %arg2[%c0, %c0_0] : memref<1x32xf32, #tpu.memory_space<vmem>>, vector<1x32xf32>
    %c0_1 = arith.constant 0 : index
    %c0_2 = arith.constant 0 : index
    %1 = vector.load %arg3[%c0_1, %c0_2] : memref<8x1xf32, #tpu.memory_space<vmem>>, vector<8x1xf32>
    %c0_i32 = arith.constant 0 : i32
    %2 = arith.index_cast %c0_i32 : i32 to index
    %c0_3 = arith.constant 0 : index
    %c0_4 = arith.constant 0 : index
    %3 = vector.load %arg1[%2, %c0_3, %c0_4] : memref<8x8x32xf32, #tpu.memory_space<vmem>>, vector<1x8x32xf32>
    %4 = vector.shape_cast %3 : vector<1x8x32xf32> to vector<8x32xf32>
    %5 = vector.broadcast %0 : vector<1x32xf32> to vector<8x32xf32>
    %6 = arith.mulf %4, %5 : vector<8x32xf32>
    %cst = arith.constant dense<0.000000e+00> : vector<8xf32>
    %7 = vector.multi_reduction <add>, %6, %cst [1] : vector<8x32xf32> to vector<8xf32>
    %8 = vector.shape_cast %7 : vector<8xf32> to vector<8x1xf32>
    %9 = arith.addf %8, %1 : vector<8x1xf32>
    %10 = math.tanh %9 : vector<8x1xf32>
    %11 = math.exp %10 : vector<8x1xf32>
    %cst_5 = arith.constant dense<0.000000e+00> : vector<1xf32>
    %12 = vector.multi_reduction <add>, %11, %cst_5 [0] : vector<8x1xf32> to vector<1xf32>
    %13 = vector.shape_cast %12 : vector<1xf32> to vector<1x1xf32>
    %14 = tpu.reciprocal %13 : vector<1x1xf32> -> vector<1x1xf32>
    %15 = vector.broadcast %14 : vector<1x1xf32> to vector<8x1xf32>
    %16 = arith.mulf %11, %15 : vector<8x1xf32>
    %cst_6 = arith.constant 1.000000e-10 : f32
    %17 = vector.broadcast %cst_6 : f32 to vector<8x1xf32>
    %18 = arith.addf %16, %17 : vector<8x1xf32>
    %19 = vector.broadcast %18 : vector<8x1xf32> to vector<8x32xf32>
    %20 = arith.mulf %19, %4 : vector<8x32xf32>
    %cst_7 = arith.constant dense<0.000000e+00> : vector<32xf32>
    %21 = vector.multi_reduction <add>, %20, %cst_7 [0] : vector<8x32xf32> to vector<32xf32>
    %22 = vector.shape_cast %21 : vector<32xf32> to vector<1x32xf32>
    %23 = arith.index_cast %c0_i32 : i32 to index
    %c0_8 = arith.constant 0 : index
    %24 = vector.load %arg4[%23, %c0_8] : memref<8x32xf32, #tpu.memory_space<vmem>>, vector<1x32xf32>
    tpu.vector_store %arg4[%23, %c0_8], %22 {strides = array<i32>} : memref<8x32xf32, #tpu.memory_space<vmem>>, vector<1x32xf32>,
    %c1_i32 = arith.constant 1 : i32
    %25 = arith.index_cast %c1_i32 : i32 to index
    %c0_9 = arith.constant 0 : index
    %c0_10 = arith.constant 0 : index
    %26 = vector.load %arg1[%25, %c0_9, %c0_10] : memref<8x8x32xf32, #tpu.memory_space<vmem>>, vector<1x8x32xf32>
    %27 = vector.shape_cast %26 : vector<1x8x32xf32> to vector<8x32xf32>
    %28 = vector.broadcast %0 : vector<1x32xf32> to vector<8x32xf32>
    %29 = arith.mulf %27, %28 : vector<8x32xf32>
    %cst_11 = arith.constant dense<0.000000e+00> : vector<8xf32>
    %30 = vector.multi_reduction <add>, %29, %cst_11 [1] : vector<8x32xf32> to vector<8xf32>
    %31 = vector.shape_cast %30 : vector<8xf32> to vector<8x1xf32>
    %32 = arith.addf %31, %1 : vector<8x1xf32>
    %33 = math.tanh %32 : vector<8x1xf32>
    %34 = math.exp %33 : vector<8x1xf32>
    %cst_12 = arith.constant dense<0.000000e+00> : vector<1xf32>
    %35 = vector.multi_reduction <add>, %34, %cst_12 [0] : vector<8x1xf32> to vector<1xf32>
    %36 = vector.shape_cast %35 : vector<1xf32> to vector<1x1xf32>
    %37 = tpu.reciprocal %36 : vector<1x1xf32> -> vector<1x1xf32>
    %38 = vector.broadcast %37 : vector<1x1xf32> to vector<8x1xf32>
    %39 = arith.mulf %34, %38 : vector<8x1xf32>
    %cst_13 = arith.constant 1.000000e-10 : f32
    %40 = vector.broadcast %cst_13 : f32 to vector<8x1xf32>
    %41 = arith.addf %39, %40 : vector<8x1xf32>
    %42 = vector.broadcast %41 : vector<8x1xf32> to vector<8x32xf32>
    %43 = arith.mulf %42, %27 : vector<8x32xf32>
    %cst_14 = arith.constant dense<0.000000e+00> : vector<32xf32>
    %44 = vector.multi_reduction <add>, %43, %cst_14 [0] : vector<8x32xf32> to vector<32xf32>
    %45 = vector.shape_cast %44 : vector<32xf32> to vector<1x32xf32>
    %46 = arith.index_cast %c1_i32 : i32 to index
    %c0_15 = arith.constant 0 : index
    %47 = vector.load %arg4[%46, %c0_15] : memref<8x32xf32, #tpu.memory_space<vmem>>, vector<1x32xf32>
    tpu.vector_store %arg4[%46, %c0_15], %45 {strides = array<i32>} : memref<8x32xf32, #tpu.memory_space<vmem>>, vector<1x32xf32>,
    %c2_i32 = arith.constant 2 : i32
    %48 = arith.index_cast %c2_i32 : i32 to index
    %c0_16 = arith.constant 0 : index
    %c0_17 = arith.constant 0 : index
    %49 = vector.load %arg1[%48, %c0_16, %c0_17] : memref<8x8x32xf32, #tpu.memory_space<vmem>>, vector<1x8x32xf32>
    %50 = vector.shape_cast %49 : vector<1x8x32xf32> to vector<8x32xf32>
    %51 = vector.broadcast %0 : vector<1x32xf32> to vector<8x32xf32>
    %52 = arith.mulf %50, %51 : vector<8x32xf32>
    %cst_18 = arith.constant dense<0.000000e+00> : vector<8xf32>
    %53 = vector.multi_reduction <add>, %52, %cst_18 [1] : vector<8x32xf32> to vector<8xf32>
    %54 = vector.shape_cast %53 : vector<8xf32> to vector<8x1xf32>
    %55 = arith.addf %54, %1 : vector<8x1xf32>
    %56 = math.tanh %55 : vector<8x1xf32>
    %57 = math.exp %56 : vector<8x1xf32>
    %cst_19 = arith.constant dense<0.000000e+00> : vector<1xf32>
    %58 = vector.multi_reduction <add>, %57, %cst_19 [0] : vector<8x1xf32> to vector<1xf32>
    %59 = vector.shape_cast %58 : vector<1xf32> to vector<1x1xf32>
    %60 = tpu.reciprocal %59 : vector<1x1xf32> -> vector<1x1xf32>
    %61 = vector.broadcast %60 : vector<1x1xf32> to vector<8x1xf32>
    %62 = arith.mulf %57, %61 : vector<8x1xf32>
    %cst_20 = arith.constant 1.000000e-10 : f32
    %63 = vector.broadcast %cst_20 : f32 to vector<8x1xf32>
    %64 = arith.addf %62, %63 : vector<8x1xf32>
    %65 = vector.broadcast %64 : vector<8x1xf32> to vector<8x32xf32>
    %66 = arith.mulf %65, %50 : vector<8x32xf32>
    %cst_21 = arith.constant dense<0.000000e+00> : vector<32xf32>
    %67 = vector.multi_reduction <add>, %66, %cst_21 [0] : vector<8x32xf32> to vector<32xf32>
    %68 = vector.shape_cast %67 : vector<32xf32> to vector<1x32xf32>
    %69 = arith.index_cast %c2_i32 : i32 to index
    %c0_22 = arith.constant 0 : index
    %70 = vector.load %arg4[%69, %c0_22] : memref<8x32xf32, #tpu.memory_space<vmem>>, vector<1x32xf32>
    tpu.vector_store %arg4[%69, %c0_22], %68 {strides = array<i32>} : memref<8x32xf32, #tpu.memory_space<vmem>>, vector<1x32xf32>,
    %c3_i32 = arith.constant 3 : i32
    %71 = arith.index_cast %c3_i32 : i32 to index
    %c0_23 = arith.constant 0 : index
    %c0_24 = arith.constant 0 : index
    %72 = vector.load %arg1[%71, %c0_23, %c0_24] : memref<8x8x32xf32, #tpu.memory_space<vmem>>, vector<1x8x32xf32>
    %73 = vector.shape_cast %72 : vector<1x8x32xf32> to vector<8x32xf32>
    %74 = vector.broadcast %0 : vector<1x32xf32> to vector<8x32xf32>
    %75 = arith.mulf %73, %74 : vector<8x32xf32>
    %cst_25 = arith.constant dense<0.000000e+00> : vector<8xf32>
    %76 = vector.multi_reduction <add>, %75, %cst_25 [1] : vector<8x32xf32> to vector<8xf32>
    %77 = vector.shape_cast %76 : vector<8xf32> to vector<8x1xf32>
    %78 = arith.addf %77, %1 : vector<8x1xf32>
    %79 = math.tanh %78 : vector<8x1xf32>
    %80 = math.exp %79 : vector<8x1xf32>
    %cst_26 = arith.constant dense<0.000000e+00> : vector<1xf32>
    %81 = vector.multi_reduction <add>, %80, %cst_26 [0] : vector<8x1xf32> to vector<1xf32>
    %82 = vector.shape_cast %81 : vector<1xf32> to vector<1x1xf32>
    %83 = tpu.reciprocal %82 : vector<1x1xf32> -> vector<1x1xf32>
    %84 = vector.broadcast %83 : vector<1x1xf32> to vector<8x1xf32>
    %85 = arith.mulf %80, %84 : vector<8x1xf32>
    %cst_27 = arith.constant 1.000000e-10 : f32
    %86 = vector.broadcast %cst_27 : f32 to vector<8x1xf32>
    %87 = arith.addf %85, %86 : vector<8x1xf32>
    %88 = vector.broadcast %87 : vector<8x1xf32> to vector<8x32xf32>
    %89 = arith.mulf %88, %73 : vector<8x32xf32>
    %cst_28 = arith.constant dense<0.000000e+00> : vector<32xf32>
    %90 = vector.multi_reduction <add>, %89, %cst_28 [0] : vector<8x32xf32> to vector<32xf32>
    %91 = vector.shape_cast %90 : vector<32xf32> to vector<1x32xf32>
    %92 = arith.index_cast %c3_i32 : i32 to index
    %c0_29 = arith.constant 0 : index
    %93 = vector.load %arg4[%92, %c0_29] : memref<8x32xf32, #tpu.memory_space<vmem>>, vector<1x32xf32>
    tpu.vector_store %arg4[%92, %c0_29], %91 {strides = array<i32>} : memref<8x32xf32, #tpu.memory_space<vmem>>, vector<1x32xf32>,
    %c4_i32 = arith.constant 4 : i32
    %94 = arith.index_cast %c4_i32 : i32 to index
    %c0_30 = arith.constant 0 : index
    %c0_31 = arith.constant 0 : index
    %95 = vector.load %arg1[%94, %c0_30, %c0_31] : memref<8x8x32xf32, #tpu.memory_space<vmem>>, vector<1x8x32xf32>
    %96 = vector.shape_cast %95 : vector<1x8x32xf32> to vector<8x32xf32>
    %97 = vector.broadcast %0 : vector<1x32xf32> to vector<8x32xf32>
    %98 = arith.mulf %96, %97 : vector<8x32xf32>
    %cst_32 = arith.constant dense<0.000000e+00> : vector<8xf32>
    %99 = vector.multi_reduction <add>, %98, %cst_32 [1] : vector<8x32xf32> to vector<8xf32>
    %100 = vector.shape_cast %99 : vector<8xf32> to vector<8x1xf32>
    %101 = arith.addf %100, %1 : vector<8x1xf32>
    %102 = math.tanh %101 : vector<8x1xf32>
    %103 = math.exp %102 : vector<8x1xf32>
    %cst_33 = arith.constant dense<0.000000e+00> : vector<1xf32>
    %104 = vector.multi_reduction <add>, %103, %cst_33 [0] : vector<8x1xf32> to vector<1xf32>
    %105 = vector.shape_cast %104 : vector<1xf32> to vector<1x1xf32>
    %106 = tpu.reciprocal %105 : vector<1x1xf32> -> vector<1x1xf32>
    %107 = vector.broadcast %106 : vector<1x1xf32> to vector<8x1xf32>
    %108 = arith.mulf %103, %107 : vector<8x1xf32>
    %cst_34 = arith.constant 1.000000e-10 : f32
    %109 = vector.broadcast %cst_34 : f32 to vector<8x1xf32>
    %110 = arith.addf %108, %109 : vector<8x1xf32>
    %111 = vector.broadcast %110 : vector<8x1xf32> to vector<8x32xf32>
    %112 = arith.mulf %111, %96 : vector<8x32xf32>
    %cst_35 = arith.constant dense<0.000000e+00> : vector<32xf32>
    %113 = vector.multi_reduction <add>, %112, %cst_35 [0] : vector<8x32xf32> to vector<32xf32>
    %114 = vector.shape_cast %113 : vector<32xf32> to vector<1x32xf32>
    %115 = arith.index_cast %c4_i32 : i32 to index
    %c0_36 = arith.constant 0 : index
    %116 = vector.load %arg4[%115, %c0_36] : memref<8x32xf32, #tpu.memory_space<vmem>>, vector<1x32xf32>
    tpu.vector_store %arg4[%115, %c0_36], %114 {strides = array<i32>} : memref<8x32xf32, #tpu.memory_space<vmem>>, vector<1x32xf32>,
    %c5_i32 = arith.constant 5 : i32
    %117 = arith.index_cast %c5_i32 : i32 to index
    %c0_37 = arith.constant 0 : index
    %c0_38 = arith.constant 0 : index
    %118 = vector.load %arg1[%117, %c0_37, %c0_38] : memref<8x8x32xf32, #tpu.memory_space<vmem>>, vector<1x8x32xf32>
    %119 = vector.shape_cast %118 : vector<1x8x32xf32> to vector<8x32xf32>
    %120 = vector.broadcast %0 : vector<1x32xf32> to vector<8x32xf32>
    %121 = arith.mulf %119, %120 : vector<8x32xf32>
    %cst_39 = arith.constant dense<0.000000e+00> : vector<8xf32>
    %122 = vector.multi_reduction <add>, %121, %cst_39 [1] : vector<8x32xf32> to vector<8xf32>
    %123 = vector.shape_cast %122 : vector<8xf32> to vector<8x1xf32>
    %124 = arith.addf %123, %1 : vector<8x1xf32>
    %125 = math.tanh %124 : vector<8x1xf32>
    %126 = math.exp %125 : vector<8x1xf32>
    %cst_40 = arith.constant dense<0.000000e+00> : vector<1xf32>
    %127 = vector.multi_reduction <add>, %126, %cst_40 [0] : vector<8x1xf32> to vector<1xf32>
    %128 = vector.shape_cast %127 : vector<1xf32> to vector<1x1xf32>
    %129 = tpu.reciprocal %128 : vector<1x1xf32> -> vector<1x1xf32>
    %130 = vector.broadcast %129 : vector<1x1xf32> to vector<8x1xf32>
    %131 = arith.mulf %126, %130 : vector<8x1xf32>
    %cst_41 = arith.constant 1.000000e-10 : f32
    %132 = vector.broadcast %cst_41 : f32 to vector<8x1xf32>
    %133 = arith.addf %131, %132 : vector<8x1xf32>
    %134 = vector.broadcast %133 : vector<8x1xf32> to vector<8x32xf32>
    %135 = arith.mulf %134, %119 : vector<8x32xf32>
    %cst_42 = arith.constant dense<0.000000e+00> : vector<32xf32>
    %136 = vector.multi_reduction <add>, %135, %cst_42 [0] : vector<8x32xf32> to vector<32xf32>
    %137 = vector.shape_cast %136 : vector<32xf32> to vector<1x32xf32>
    %138 = arith.index_cast %c5_i32 : i32 to index
    %c0_43 = arith.constant 0 : index
    %139 = vector.load %arg4[%138, %c0_43] : memref<8x32xf32, #tpu.memory_space<vmem>>, vector<1x32xf32>
    tpu.vector_store %arg4[%138, %c0_43], %137 {strides = array<i32>} : memref<8x32xf32, #tpu.memory_space<vmem>>, vector<1x32xf32>,
    %c6_i32 = arith.constant 6 : i32
    %140 = arith.index_cast %c6_i32 : i32 to index
    %c0_44 = arith.constant 0 : index
    %c0_45 = arith.constant 0 : index
    %141 = vector.load %arg1[%140, %c0_44, %c0_45] : memref<8x8x32xf32, #tpu.memory_space<vmem>>, vector<1x8x32xf32>
    %142 = vector.shape_cast %141 : vector<1x8x32xf32> to vector<8x32xf32>
    %143 = vector.broadcast %0 : vector<1x32xf32> to vector<8x32xf32>
    %144 = arith.mulf %142, %143 : vector<8x32xf32>
    %cst_46 = arith.constant dense<0.000000e+00> : vector<8xf32>
    %145 = vector.multi_reduction <add>, %144, %cst_46 [1] : vector<8x32xf32> to vector<8xf32>
    %146 = vector.shape_cast %145 : vector<8xf32> to vector<8x1xf32>
    %147 = arith.addf %146, %1 : vector<8x1xf32>
    %148 = math.tanh %147 : vector<8x1xf32>
    %149 = math.exp %148 : vector<8x1xf32>
    %cst_47 = arith.constant dense<0.000000e+00> : vector<1xf32>
    %150 = vector.multi_reduction <add>, %149, %cst_47 [0] : vector<8x1xf32> to vector<1xf32>
    %151 = vector.shape_cast %150 : vector<1xf32> to vector<1x1xf32>
    %152 = tpu.reciprocal %151 : vector<1x1xf32> -> vector<1x1xf32>
    %153 = vector.broadcast %152 : vector<1x1xf32> to vector<8x1xf32>
    %154 = arith.mulf %149, %153 : vector<8x1xf32>
    %cst_48 = arith.constant 1.000000e-10 : f32
    %155 = vector.broadcast %cst_48 : f32 to vector<8x1xf32>
    %156 = arith.addf %154, %155 : vector<8x1xf32>
    %157 = vector.broadcast %156 : vector<8x1xf32> to vector<8x32xf32>
    %158 = arith.mulf %157, %142 : vector<8x32xf32>
    %cst_49 = arith.constant dense<0.000000e+00> : vector<32xf32>
    %159 = vector.multi_reduction <add>, %158, %cst_49 [0] : vector<8x32xf32> to vector<32xf32>
    %160 = vector.shape_cast %159 : vector<32xf32> to vector<1x32xf32>
    %161 = arith.index_cast %c6_i32 : i32 to index
    %c0_50 = arith.constant 0 : index
    %162 = vector.load %arg4[%161, %c0_50] : memref<8x32xf32, #tpu.memory_space<vmem>>, vector<1x32xf32>
    tpu.vector_store %arg4[%161, %c0_50], %160 {strides = array<i32>} : memref<8x32xf32, #tpu.memory_space<vmem>>, vector<1x32xf32>,
    %c7_i32 = arith.constant 7 : i32
    %163 = arith.index_cast %c7_i32 : i32 to index
    %c0_51 = arith.constant 0 : index
    %c0_52 = arith.constant 0 : index
    %164 = vector.load %arg1[%163, %c0_51, %c0_52] : memref<8x8x32xf32, #tpu.memory_space<vmem>>, vector<1x8x32xf32>
    %165 = vector.shape_cast %164 : vector<1x8x32xf32> to vector<8x32xf32>
    %166 = vector.broadcast %0 : vector<1x32xf32> to vector<8x32xf32>
    %167 = arith.mulf %165, %166 : vector<8x32xf32>
    %cst_53 = arith.constant dense<0.000000e+00> : vector<8xf32>
    %168 = vector.multi_reduction <add>, %167, %cst_53 [1] : vector<8x32xf32> to vector<8xf32>
    %169 = vector.shape_cast %168 : vector<8xf32> to vector<8x1xf32>
    %170 = arith.addf %169, %1 : vector<8x1xf32>
    %171 = math.tanh %170 : vector<8x1xf32>
    %172 = math.exp %171 : vector<8x1xf32>
    %cst_54 = arith.constant dense<0.000000e+00> : vector<1xf32>
    %173 = vector.multi_reduction <add>, %172, %cst_54 [0] : vector<8x1xf32> to vector<1xf32>
    %174 = vector.shape_cast %173 : vector<1xf32> to vector<1x1xf32>
    %175 = tpu.reciprocal %174 : vector<1x1xf32> -> vector<1x1xf32>
    %176 = vector.broadcast %175 : vector<1x1xf32> to vector<8x1xf32>
    %177 = arith.mulf %172, %176 : vector<8x1xf32>
    %cst_55 = arith.constant 1.000000e-10 : f32
    %178 = vector.broadcast %cst_55 : f32 to vector<8x1xf32>
    %179 = arith.addf %177, %178 : vector<8x1xf32>
    %180 = vector.broadcast %179 : vector<8x1xf32> to vector<8x32xf32>
    %181 = arith.mulf %180, %165 : vector<8x32xf32>
    %cst_56 = arith.constant dense<0.000000e+00> : vector<32xf32>
    %182 = vector.multi_reduction <add>, %181, %cst_56 [0] : vector<8x32xf32> to vector<32xf32>
    %183 = vector.shape_cast %182 : vector<32xf32> to vector<1x32xf32>
    %184 = arith.index_cast %c7_i32 : i32 to index
    %c0_57 = arith.constant 0 : index
    %185 = vector.load %arg4[%184, %c0_57] : memref<8x32xf32, #tpu.memory_space<vmem>>, vector<1x32xf32>
    tpu.vector_store %arg4[%184, %c0_57], %183 {strides = array<i32>} : memref<8x32xf32, #tpu.memory_space<vmem>>, vector<1x32xf32>,
    %c8_i32 = arith.constant 8 : i32
    return
  }
  func.func @transform_0(%arg0: i32) -> (i32, i32, i32) {
    %c0_i32 = arith.constant 0 : i32
    %c0_i32_0 = arith.constant 0 : i32
    %c0_i32_1 = arith.constant 0 : i32
    return %arg0, %c0_i32, %c0_i32_0 : i32, i32, i32
  }
  func.func @transform_1(%arg0: i32) -> (i32, i32) {
    %c0_i32 = arith.constant 0 : i32
    %c0_i32_0 = arith.constant 0 : i32
    %c0_i32_1 = arith.constant 0 : i32
    return %c0_i32, %c0_i32_0 : i32, i32
  }
  func.func @transform_2(%arg0: i32) -> (i32, i32) {
    %c0_i32 = arith.constant 0 : i32
    %c0_i32_0 = arith.constant 0 : i32
    %c0_i32_1 = arith.constant 0 : i32
    return %c0_i32, %c0_i32_0 : i32, i32
  }
  func.func @transform_3(%arg0: i32) -> (i32, i32) {
    %c0_i32 = arith.constant 0 : i32
    %c0_i32_0 = arith.constant 0 : i32
    return %arg0, %c0_i32 : i32, i32
  }
}

</mosaic_0001>

<llo_original>
// kernel: tpu_custom_call.1
$region0: #{tpu_custom_call.1}
  #allocation0 [shape = 'u32[]', space=smem, size = 0x4, offset = 0x4, fixed_abs, tag = 'smem constant byte address 0x4 - core index']
  #allocation1 [shape = 'u32[144,128]{1,0:T(1,128)}', space=vmem, size = 0x12000, scoped, tag = 'internal scratch']
  %s0 = inlined_call_operand.hbm [shape: f32[2,8,32], index: 0, kind: input, shape index: {}]
  %s1 = inlined_call_operand.vmem [shape: f32[1,32], index: 1, kind: input, shape index: {}]
  %s2 = inlined_call_operand.vmem [shape: f32[8,1], index: 2, kind: input, shape index: {}]
  %s3 = inlined_call_operand.hbm [shape: f32[2,32], index: 3, kind: output, shape index: {}]
  %s4 = sld [smem:[#allocation0]]
  $region26: #{tpu_custom_call.1} parent=0
    _
  %s6 = ssub.s32 1, %s4
  %s7 = scalar_select 0, %s6, %s4
  $region1: #{tpu_custom_call.1} parent=0
    #allocation2 [shape = 'u8[32768]{0}', space=vmem, size = 0x8000, scoped, tag = 'input window, operand 0, single buffered']
    #allocation3 [shape = 's32[1]{0}', space=sflag, size = 0x4, scoped, tag = 'scoped memory for tpu_custom_call.1']
    #allocation4 [shape = 's32[1]{0}', space=sflag, size = 0x4, scoped, tag = 'scoped memory for tpu_custom_call.1']
    #allocation5 [shape = 'u8[4096]{0}', space=vmem, size = 0x1000, scoped, tag = 'output window, operand 0, single buffered']
    %8 = vsyncpa [#allocation3], 0
    %9 = vsyncpa [#allocation4], 0
    // Predicated region
    $region2: #{tpu_custom_call.1} parent=1 // pred_check
      _
    $region3: #{tpu_custom_call.1} parent=1 // pred_check_branch
      %11 = sbr.rel (0) target = $region5
    $region4: #{tpu_custom_call.1} parent=1 // pred_region
      %s13 = ssub.s32 1024, 256
      %14 = vsyncadd [#allocation3], %s13
      %s15 = sshll.u32 [#allocation2], 4
      %s16 = int_to_ptr.vmem [resolvable:$true] %s15
      %21 = dma.hbm_to_vmem [thread:$0]  %s0, 256, %s16, [#allocation3], 128, 128, 8
    $region5: #{tpu_custom_call.1} parent=1 // pred_fallthru
      _
    // Predicated region
    $region6: #{tpu_custom_call.1} parent=1 // pred_check
      _
    $region7: #{tpu_custom_call.1} parent=1 // pred_check_branch
      %23 = sbr.rel (0) target = $region9
    $region8: #{tpu_custom_call.1} parent=1 // pred_region
      _
    $region9: #{tpu_custom_call.1} parent=1 // pred_fallthru
      _
    // Predicated region
    $region10: #{tpu_custom_call.1} parent=1 // pred_check
      _
    $region11: #{tpu_custom_call.1} parent=1 // pred_check_branch
      %25 = sbr.rel (0) target = $region13
    $region12: #{tpu_custom_call.1} parent=1 // pred_region
      _
    $region13: #{tpu_custom_call.1} parent=1 // pred_fallthru
      _
    // Predicated region
    $region14: #{tpu_custom_call.1} parent=1 // pred_check
      _
    $region15: #{tpu_custom_call.1} parent=1 // pred_check_branch
      %27 = sbr.rel (0) target = $region17
    $region16: #{tpu_custom_call.1} parent=1 // pred_region
      %28 = dma.done [#allocation3], 1024
    $region17: #{tpu_custom_call.1} parent=1 // pred_fallthru
      _
    %v29 = vld [vmem:[%s1] sm:$0x1]
    %v30 = vld [vmem:[%s2] sm:$0xff]
    %v31 = vld [vmem:[#allocation2] sm:$0xff]
    %v33 = vlaneseq
    %v34 = vshrl.u32 %v33, 7
    %v35 = vsub.s32 0, %v34
    %v36 = vrot.slane %v29, %v35
    %v38 = vmul.f32 %v31, %v36
    %vm39 = vcmask 261120
    %v40 = vsel %vm39, %v38, 0.0
    %41 = vadd.xlane.f32.xlu0 %v40
    %v42 = vpop.xlane.xlu0 %41
    %v43 = vadd.f32 %v42, %v30
    %v44 = vtanh.pop %v43
    %v45 = vmul.f32 %v44, 1.442695
    %v46 = vpow.pop %v45
    %vm47 = vcmask 7168
    %v48 = vsel %vm47, %v46, 0.0
    %v49 = vrot.slane %v48, 4
    %v50 = vadd.f32 %v48, %v49
    %v51 = vrot.slane %v50, 2
    %v52 = vadd.f32 %v50, %v51
    %v53 = vrot.slane %v52, 1
    %v54 = vadd.f32 %v52, %v53
    %v55 = vrcp.pop %v54
    %v56 = vmul.f32 %v46, %v55
    %v57 = vadd.f32 %v56, 1e-10
    %59 = vset.pattern.permute.xlu0 0
    %60 = vperm.xlu0 %59, %v57
    %v61 = vpop.permute.xlu0 %60
    %v63 = vmul.f32 %v61, %v31
    %v64 = vsel %vm39, %v63, 0.0
    %v65 = vrot.slane %v64, 4
    %v66 = vadd.f32 %v64, %v65
    %v67 = vrot.slane %v66, 2
    %v68 = vadd.f32 %v66, %v67
    %v69 = vrot.slane %v68, 1
    %v70 = vadd.f32 %v68, %v69
    %vm71 = vcmask 253952
    %72 = vst.msk [vmem:[#allocation5] sm:$0x1] %vm71, %v70
    %s73 = scalar_lea.vmem [#allocation2], 8
    %v74 = vld [vmem:[%s73] sm:$0xff]
    %v75 = vmul.f32 %v74, %v36
    %v76 = vsel %vm39, %v75, 0.0
    %77 = vadd.xlane.f32.xlu0 %v76
    %v78 = vpop.xlane.xlu0 %77
    %v79 = vadd.f32 %v78, %v30
    %v80 = vtanh.pop %v79
    %v81 = vmul.f32 %v80, 1.442695
    %v82 = vpow.pop %v81
    %v83 = vsel %vm47, %v82, 0.0
    %v84 = vrot.slane %v83, 4
    %v85 = vadd.f32 %v83, %v84
    %v86 = vrot.slane %v85, 2
    %v87 = vadd.f32 %v85, %v86
    %v88 = vrot.slane %v87, 1
    %v89 = vadd.f32 %v87, %v88
    %v90 = vrcp.pop %v89
    %v91 = vmul.f32 %v82, %v90
    %v92 = vadd.f32 %v91, 1e-10
    %94 = vset.pattern.permute.xlu0 0
    %95 = vperm.xlu0 %94, %v92
    %v96 = vpop.permute.xlu0 %95
    %v98 = vmul.f32 %v96, %v74
    %v99 = vsel %vm39, %v98, 0.0
    %v100 = vrot.slane %v99, 4
    %v101 = vadd.f32 %v99, %v100
    %v102 = vrot.slane %v101, 2
    %v103 = vadd.f32 %v101, %v102
    %v104 = vrot.slane %v103, 1
    %v105 = vadd.f32 %v103, %v104
    %106 = vst.msk [vmem:[#allocation5 + $0x1] sm:$0x1] %vm71, %v105
    %s107 = scalar_lea.vmem [#allocation2], 16
    %v108 = vld [vmem:[%s107] sm:$0xff]
    %v109 = vmul.f32 %v108, %v36
    %v110 = vsel %vm39, %v109, 0.0
    %111 = vadd.xlane.f32.xlu0 %v110
    %v112 = vpop.xlane.xlu0 %111
    %v113 = vadd.f32 %v112, %v30
    %v114 = vtanh.pop %v113
    %v115 = vmul.f32 %v114, 1.442695
    %v116 = vpow.pop %v115
    %v117 = vsel %vm47, %v116, 0.0
    %v118 = vrot.slane %v117, 4
    %v119 = vadd.f32 %v117, %v118
    %v120 = vrot.slane %v119, 2
    %v121 = vadd.f32 %v119, %v120
    %v122 = vrot.slane %v121, 1
    %v123 = vadd.f32 %v121, %v122
    %v124 = vrcp.pop %v123
    %v125 = vmul.f32 %v116, %v124
    %v126 = vadd.f32 %v125, 1e-10
    %128 = vset.pattern.permute.xlu0 0
    %129 = vperm.xlu0 %128, %v126
    %v130 = vpop.permute.xlu0 %129
    %v132 = vmul.f32 %v130, %v108
    %v133 = vsel %vm39, %v132, 0.0
    %v134 = vrot.slane %v133, 4
    %v135 = vadd.f32 %v133, %v134
    %v136 = vrot.slane %v135, 2
    %v137 = vadd.f32 %v135, %v136
    %v138 = vrot.slane %v137, 1
    %v139 = vadd.f32 %v137, %v138
    %140 = vst.msk [vmem:[#allocation5 + $0x2] sm:$0x1] %vm71, %v139
    %s141 = scalar_lea.vmem [#allocation2], 24
    %v142 = vld [vmem:[%s141] sm:$0xff]
    %v143 = vmul.f32 %v142, %v36
    %v144 = vsel %vm39, %v143, 0.0
    %145 = vadd.xlane.f32.xlu0 %v144
    %v146 = vpop.xlane.xlu0 %145
    %v147 = vadd.f32 %v146, %v30
    %v148 = vtanh.pop %v147
    %v149 = vmul.f32 %v148, 1.442695
    %v150 = vpow.pop %v149
    %v151 = vsel %vm47, %v150, 0.0
    %v152 = vrot.slane %v151, 4
    %v153 = vadd.f32 %v151, %v152
    %v154 = vrot.slane %v153, 2
    %v155 = vadd.f32 %v153, %v154
    %v156 = vrot.slane %v155, 1
    %v157 = vadd.f32 %v155, %v156
    %v158 = vrcp.pop %v157
    %v159 = vmul.f32 %v150, %v158
    %v160 = vadd.f32 %v159, 1e-10
    %162 = vset.pattern.permute.xlu0 0
    %163 = vperm.xlu0 %162, %v160
    %v164 = vpop.permute.xlu0 %163
    %v166 = vmul.f32 %v164, %v142
    %v167 = vsel %vm39, %v166, 0.0
    %v168 = vrot.slane %v167, 4
    %v169 = vadd.f32 %v167, %v168
    %v170 = vrot.slane %v169, 2
    %v171 = vadd.f32 %v169, %v170
    %v172 = vrot.slane %v171, 1
    %v173 = vadd.f32 %v171, %v172
    %174 = vst.msk [vmem:[#allocation5 + $0x3] sm:$0x1] %vm71, %v173
    %s175 = scalar_lea.vmem [#allocation2], 32
    %v176 = vld [vmem:[%s175] sm:$0xff]
    %v177 = vmul.f32 %v176, %v36
    %v178 = vsel %vm39, %v177, 0.0
    %179 = vadd.xlane.f32.xlu0 %v178
    %v180 = vpop.xlane.xlu0 %179
    %v181 = vadd.f32 %v180, %v30
    %v182 = vtanh.pop %v181
    %v183 = vmul.f32 %v182, 1.442695
    %v184 = vpow.pop %v183
    %v185 = vsel %vm47, %v184, 0.0
    %v186 = vrot.slane %v185, 4
    %v187 = vadd.f32 %v185, %v186
    %v188 = vrot.slane %v187, 2
    %v189 = vadd.f32 %v187, %v188
    %v190 = vrot.slane %v189, 1
    %v191 = vadd.f32 %v189, %v190
    %v192 = vrcp.pop %v191
    %v193 = vmul.f32 %v184, %v192
    %v194 = vadd.f32 %v193, 1e-10
    %196 = vset.pattern.permute.xlu0 0
    %197 = vperm.xlu0 %196, %v194
    %v198 = vpop.permute.xlu0 %197
    %v200 = vmul.f32 %v198, %v176
    %v201 = vsel %vm39, %v200, 0.0
    %v202 = vrot.slane %v201, 4
    %v203 = vadd.f32 %v201, %v202
    %v204 = vrot.slane %v203, 2
    %v205 = vadd.f32 %v203, %v204
    %v206 = vrot.slane %v205, 1
    %v207 = vadd.f32 %v205, %v206
    %208 = vst.msk [vmem:[#allocation5 + $0x4] sm:$0x1] %vm71, %v207
    %s209 = scalar_lea.vmem [#allocation2], 40
    %v210 = vld [vmem:[%s209] sm:$0xff]
    %v211 = vmul.f32 %v210, %v36
    %v212 = vsel %vm39, %v211, 0.0
    %213 = vadd.xlane.f32.xlu0 %v212
    %v214 = vpop.xlane.xlu0 %213
    %v215 = vadd.f32 %v214, %v30
    %v216 = vtanh.pop %v215
    %v217 = vmul.f32 %v216, 1.442695
    %v218 = vpow.pop %v217
    %v219 = vsel %vm47, %v218, 0.0
    %v220 = vrot.slane %v219, 4
    %v221 = vadd.f32 %v219, %v220
    %v222 = vrot.slane %v221, 2
    %v223 = vadd.f32 %v221, %v222
    %v224 = vrot.slane %v223, 1
    %v225 = vadd.f32 %v223, %v224
    %v226 = vrcp.pop %v225
    %v227 = vmul.f32 %v218, %v226
    %v228 = vadd.f32 %v227, 1e-10
    %230 = vset.pattern.permute.xlu0 0
    %231 = vperm.xlu0 %230, %v228
    %v232 = vpop.permute.xlu0 %231
    %v234 = vmul.f32 %v232, %v210
    %v235 = vsel %vm39, %v234, 0.0
    %v236 = vrot.slane %v235, 4
    %v237 = vadd.f32 %v235, %v236
    %v238 = vrot.slane %v237, 2
    %v239 = vadd.f32 %v237, %v238
    %v240 = vrot.slane %v239, 1
    %v241 = vadd.f32 %v239, %v240
    %242 = vst.msk [vmem:[#allocation5 + $0x5] sm:$0x1] %vm71, %v241
    %s243 = scalar_lea.vmem [#allocation2], 48
    %v244 = vld [vmem:[%s243] sm:$0xff]
    %v245 = vmul.f32 %v244, %v36
    %v246 = vsel %vm39, %v245, 0.0
    %247 = vadd.xlane.f32.xlu0 %v246
    %v248 = vpop.xlane.xlu0 %247
    %v249 = vadd.f32 %v248, %v30
    %v250 = vtanh.pop %v249
    %v251 = vmul.f32 %v250, 1.442695
    %v252 = vpow.pop %v251
    %v253 = vsel %vm47, %v252, 0.0
    %v254 = vrot.slane %v253, 4
    %v255 = vadd.f32 %v253, %v254
    %v256 = vrot.slane %v255, 2
    %v257 = vadd.f32 %v255, %v256
    %v258 = vrot.slane %v257, 1
    %v259 = vadd.f32 %v257, %v258
    %v260 = vrcp.pop %v259
    %v261 = vmul.f32 %v252, %v260
    %v262 = vadd.f32 %v261, 1e-10
    %264 = vset.pattern.permute.xlu0 0
    %265 = vperm.xlu0 %264, %v262
    %v266 = vpop.permute.xlu0 %265
    %v268 = vmul.f32 %v266, %v244
    %v269 = vsel %vm39, %v268, 0.0
    %v270 = vrot.slane %v269, 4
    %v271 = vadd.f32 %v269, %v270
    %v272 = vrot.slane %v271, 2
    %v273 = vadd.f32 %v271, %v272
    %v274 = vrot.slane %v273, 1
    %v275 = vadd.f32 %v273, %v274
    %276 = vst.msk [vmem:[#allocation5 + $0x6] sm:$0x1] %vm71, %v275
    %s277 = scalar_lea.vmem [#allocation2], 56
    %v278 = vld [vmem:[%s277] sm:$0xff]
    %v279 = vmul.f32 %v278, %v36
    %v280 = vsel %vm39, %v279, 0.0
    %281 = vadd.xlane.f32.xlu0 %v280
    %v282 = vpop.xlane.xlu0 %281
    %v283 = vadd.f32 %v282, %v30
    %v284 = vtanh.pop %v283
    %v285 = vmul.f32 %v284, 1.442695
    %v286 = vpow.pop %v285
    %v287 = vsel %vm47, %v286, 0.0
    %v288 = vrot.slane %v287, 4
    %v289 = vadd.f32 %v287, %v288
    %v290 = vrot.slane %v289, 2
    %v291 = vadd.f32 %v289, %v290
    %v292 = vrot.slane %v291, 1
    %v293 = vadd.f32 %v291, %v292
    %v294 = vrcp.pop %v293
    %v295 = vmul.f32 %v286, %v294
    %v296 = vadd.f32 %v295, 1e-10
    %298 = vset.pattern.permute.xlu0 0
    %299 = vperm.xlu0 %298, %v296
    %v300 = vpop.permute.xlu0 %299
    %v302 = vmul.f32 %v300, %v278
    %v303 = vsel %vm39, %v302, 0.0
    %v304 = vrot.slane %v303, 4
    %v305 = vadd.f32 %v303, %v304
    %v306 = vrot.slane %v305, 2
    %v307 = vadd.f32 %v305, %v306
    %v308 = vrot.slane %v307, 1
    %v309 = vadd.f32 %v307, %v308
    %310 = vst.msk [vmem:[#allocation5 + $0x7] sm:$0x1] %vm71, %v309
    // Predicated region
    $region18: #{tpu_custom_call.1} parent=1 // pred_check
      _
    $region19: #{tpu_custom_call.1} parent=1 // pred_check_branch
      %312 = sbr.rel (0) target = $region21
    $region20: #{tpu_custom_call.1} parent=1 // pred_region
      %s314 = ssub.s32 128, 32
      %315 = vsyncadd [#allocation4], %s314
      %s316 = sshll.u32 [#allocation5], 4
      %s317 = int_to_ptr.vmem [resolvable:$true] %s316
      %322 = dma.vmem_to_hbm [thread:$0]  %s317, 32, %s3, [#allocation4], 32, 32, 2
    $region21: #{tpu_custom_call.1} parent=1 // pred_fallthru
      _
    // Predicated region
    $region22: #{tpu_custom_call.1} parent=1 // pred_check
      _
    $region23: #{tpu_custom_call.1} parent=1 // pred_check_branch
      %324 = sbr.rel (0) target = $region25
    $region24: #{tpu_custom_call.1} parent=1 // pred_region
      %325 = dma.done [#allocation4], 128
    $region25: #{tpu_custom_call.1} parent=1 // pred_fallthru
      _
    %326 = vsyncpa [#allocation3], 1
    %327 = vsyncpa [#allocation4], 1

</llo_original>
